<compile_context>
chip_gen: v6e
topology: v6e:2x2x1
jax: 0.10.0
libtpu: 0.0.40
codegen_flags: <defaults>
</compile_context>

<pallas_src>
import functools

import jax
import jax.numpy as jnp
from jax.experimental import pallas as pl
from jax.experimental.pallas import tpu as pltpu


def _round_up(x, m):
    return ((x + m - 1) // m) * m


def _polar_iou_packed_kernel(pred_ref, gt_ref, seg_ref, out_ref, *, d, rows_valid):
    """Lane-dense packed kernel: each (tile_r, 128) row holds 128 // d rays-rows."""
    tile_r = pred_ref.shape[0]
    p = pred_ref[...]                                   # (tile_r, 128)
    g = gt_ref[...]
    mx = jnp.maximum(p, g).astype(jnp.float32)
    mn = jnp.minimum(p, g).astype(jnp.float32)

    # Segmented per-original-row sums on the MXU: seg is a (128,128) 0/1
    # block-diagonal matrix, so every lane of a group ends up holding that
    # group's sum.  HIGHEST precision keeps the f32 sums exact enough for the
    # 1e-5 tolerance; the MXU is otherwise idle in this kernel.
    seg = seg_ref[...]
    smax = jnp.dot(mx, seg, preferred_element_type=jnp.float32,
                   precision=jax.lax.Precision.HIGHEST)
    smin = jnp.dot(mn, seg, preferred_element_type=jnp.float32,
                   precision=jax.lax.Precision.HIGHEST)

    # Group-head lanes (one per original row) keep log(sum_max) - log(sum_min);
    # everything else (non-head lanes, and garbage rows read past the end of
    # the array by the partial final block) contributes exactly 0.
    lane = jax.lax.broadcasted_iota(jnp.int32, (1, 128), 1)
    head = (lane & (d - 1)) == 0                        # (1,128), d is a power of 2
    rows_left = rows_valid - pl.program_id(0) * tile_r
    row = jax.lax.broadcasted_iota(jnp.int32, (tile_r, 128), 0)
    keep = head & (row < rows_left)
    per_lane = jnp.where(keep, jnp.log(smax) - jnp.log(smin), 0.0)

    # Fold this tile down to one lane-dense (8,128) partial-sum block.
    out_ref[...] = jnp.sum(per_lane.reshape(tile_r // 8, 8, 128), axis=0)


def polar_iou_loss(y_pred, y_gt, *, tile_rows=1024):
    assert y_pred.shape == y_gt.shape and y_pred.ndim == 2
    B, D = y_pred.shape

    if D > 128:
        # TODO(synk): D > 128 rays (wider than one vreg) falls back to plain XLA.
        sm = jnp.sum(jnp.maximum(y_pred, y_gt).astype(jnp.float32), axis=1)
        sn = jnp.sum(jnp.minimum(y_pred, y_gt).astype(jnp.float32), axis=1)
        return jnp.mean(jnp.log(sm) - jnp.log(sn)).reshape(1)

    d = max(1, pl.next_power_of_2(D))          # pad rays to a power of two
    group = 128 // d                           # original rows per packed row

    # Rows of the packed (r, 128) view; keep r >= 8 so blocks stay legal.
    b_target = _round_up(B, group)
    if b_target // group < 8:
        b_target = 8 * group
    r = b_target // group

    pad_rows, pad_lanes = b_target - B, d - D
    if pad_rows or pad_lanes:
        # Only misaligned batches / non-power-of-two ray counts pay this copy.
        # Padded rows are 1.0 (log(1) = 0); padded rays are 0.0 (adds 0 to both
        # the max-sum and the min-sum), so padding never changes the loss.
        pad = ((0, pad_rows), (0, pad_lanes))
        cv = ((1.0, 1.0), (0.0, 0.0))
        pred2 = jnp.pad(y_pred, pad, constant_values=cv)
        gt2 = jnp.pad(y_gt, pad, constant_values=cv)
    else:
        pred2, gt2 = y_pred, y_gt               # zero-copy path
    pred_p = pred2.reshape(r, 128)              # metadata-only reshape
    gt_p = gt2.reshape(r, 128)

    # Big tiles for the HBM roofline, but >= 2 grid steps whenever possible so
    # both v7x TensorCores get work (the grid axis is "parallel").  The final
    # block may run past r; the kernel masks those rows.
    tile_r = max(8, _round_up(min(tile_rows, _round_up(r, 8)), 8))
    if _round_up(r, 8) > 8 and pl.cdiv(r, tile_r) < 2:
        tile_r = _round_up(pl.cdiv(r, 2), 8)
    num_tiles = pl.cdiv(r, tile_r)

    # (128,128) block-diagonal ones: seg[j,k] = 1 iff lanes j,k share a group.
    idx = jnp.arange(128, dtype=jnp.int32)
    seg = (idx[:, None] // d == idx[None, :] // d).astype(jnp.float32)

    kernel = functools.partial(_polar_iou_packed_kernel, d=d, rows_valid=r)
    elt = jnp.dtype(y_pred.dtype).itemsize
    partials = pl.pallas_call(
        kernel,
        out_shape=jax.ShapeDtypeStruct((num_tiles * 8, 128), jnp.float32),
        grid=(num_tiles,),
        in_specs=[
            pl.BlockSpec((tile_r, 128), lambda i: (i, 0)),
            pl.BlockSpec((tile_r, 128), lambda i: (i, 0)),
            pl.BlockSpec((128, 128), lambda i: (0, 0)),   # fetched once, revisited
        ],
        out_specs=pl.BlockSpec((8, 128), lambda i: (i, 0)),
        compiler_params=pltpu.CompilerParams(
            dimension_semantics=("parallel",),
        ),
        cost_estimate=pl.CostEstimate(
            flops=int(r * 128 * 6 + 4 * r * 128 * 128),
            transcendentals=int(2 * r * 128),
            bytes_accessed=int(2 * r * 128 * elt + 128 * 128 * 4
                               + num_tiles * 8 * 128 * 4),
        ),
    )(pred_p, gt_p, seg)

    # Final mean divides by the GLOBAL batch size (padding/masked rows are 0).
    return (jnp.sum(partials) / B).reshape(1)


def _reference(y_pred, y_gt):
    sm = jnp.sum(jnp.maximum(y_pred, y_gt), axis=1)
    sn = jnp.sum(jnp.minimum(y_pred, y_gt), axis=1)
    return jnp.mean(jnp.log(sm / sn)).reshape(1)


if __name__ == "__main__":
    key = jax.random.PRNGKey(0)

    # (batch, num_rays, tile_rows):
    #   (2,16)    tiny, misaligned batch  -> small 1.0-pad, single tile
    #   (256,16)  aligned                 -> zero-copy reshape, 2-tile parallel grid
    #   (104,16)  aligned, ragged tail    -> zero-copy + partial final block mask
    #   (16,36)   non-power-of-two rays   -> zero-pad D 36->64, packed path
    cases = [
        (2, 16, 1024),
        (256, 16, 1024),
        (104, 16, 8),
        (16, 36, 1024),
    ]
    for B, D, tile_rows in cases:
        key, k1, k2 = jax.random.split(key, 3)
        y_pred = jax.random.uniform(k1, (B, D), jnp.float32, minval=0.1, maxval=2.0)
        y_gt = jax.random.uniform(k2, (B, D), jnp.float32, minval=0.1, maxval=2.0)

        loss = polar_iou_loss(y_pred, y_gt, tile_rows=tile_rows)
        jax.block_until_ready(loss)
        ref = _reference(y_pred, y_gt)
        assert jnp.allclose(loss, ref, rtol=1e-5, atol=1e-5), (B, D, loss, ref)

    print("KERNEL_OK")
</pallas_src>

<mosaic_0001>
module attributes {stable_mosaic.version = 11 : i64} {
  func.func @_polar_iou_packed_kernel(%arg0: i32, %arg1: memref<8x128xf32, #tpu.memory_space<vmem>>, %arg2: memref<8x128xf32, #tpu.memory_space<vmem>>, %arg3: memref<128x128xf32, #tpu.memory_space<vmem>>, %arg4: memref<8x128xf32, #tpu.memory_space<vmem>>) attributes {dimension_semantics = [#tpu.dimension_semantics<parallel>], iteration_bounds = array<i64: 1>, scalar_prefetch = 0 : i64, scratch_operands = 0 : i64, tpu.core_type = #tpu.core_type<tc>, window_params = [{transform_indices = @transform_0, window_bounds = array<i64: 8, 128>}, {transform_indices = @transform_1, window_bounds = array<i64: 8, 128>}, {pipeline_mode = #tpu.pipeline_mode<synchronous>, transform_indices = @transform_2, window_bounds = array<i64: 128, 128>}, {transform_indices = @transform_3, window_bounds = array<i64: 8, 128>}]} {
    %c0 = arith.constant 0 : index
    %c0_0 = arith.constant 0 : index
    %0 = vector.load %arg1[%c0, %c0_0] : memref<8x128xf32, #tpu.memory_space<vmem>>, vector<8x128xf32>
    %c0_1 = arith.constant 0 : index
    %c0_2 = arith.constant 0 : index
    %1 = vector.load %arg2[%c0_1, %c0_2] : memref<8x128xf32, #tpu.memory_space<vmem>>, vector<8x128xf32>
    %2 = arith.maximumf %0, %1 : vector<8x128xf32>
    %3 = arith.minimumf %0, %1 : vector<8x128xf32>
    %c0_3 = arith.constant 0 : index
    %c0_4 = arith.constant 0 : index
    %4 = vector.load %arg3[%c0_3, %c0_4] : memref<128x128xf32, #tpu.memory_space<vmem>>, vector<128x128xf32>
    %cst = arith.constant dense<0.000000e+00> : vector<8x128xf32>
    %5 = tpu.matmul %2, %4, %cst {dimension_numbers = #tpu.dot_dimension_numbers<[1], [0], [0], [1], [0, 0, 1, 1], [], []>, precision = #tpu.contract_precision<fp32>} : vector<8x128xf32>, vector<128x128xf32>, vector<8x128xf32> -> vector<8x128xf32>
    %cst_5 = arith.constant dense<0.000000e+00> : vector<8x128xf32>
    %6 = tpu.matmul %3, %4, %cst_5 {dimension_numbers = #tpu.dot_dimension_numbers<[1], [0], [0], [1], [0, 0, 1, 1], [], []>, precision = #tpu.contract_precision<fp32>} : vector<8x128xf32>, vector<128x128xf32>, vector<8x128xf32> -> vector<8x128xf32>
    %7 = tpu.iota {dimensions = array<i32: 1>} : vector<1x128xi32>
    %c15_i32 = arith.constant 15 : i32
    %8 = vector.broadcast %c15_i32 : i32 to vector<1x128xi32>
    %9 = arith.andi %7, %8 : vector<1x128xi32>
    %c0_i32 = arith.constant 0 : i32
    %10 = vector.broadcast %c0_i32 : i32 to vector<1x128xi32>
    %11 = arith.cmpi eq, %9, %10 : vector<1x128xi32>
    %c8_i32 = arith.constant 8 : i32
    %12 = arith.muli %arg0, %c8_i32 : i32
    %c8_i32_6 = arith.constant 8 : i32
    %13 = arith.subi %c8_i32_6, %12 : i32
    %14 = tpu.iota {dimensions = array<i32: 0>} : vector<8x128xi32>
    %15 = vector.broadcast %13 : i32 to vector<8x128xi32>
    %16 = arith.cmpi slt, %14, %15 : vector<8x128xi32>
    %17 = vector.broadcast %11 : vector<1x128xi1> to vector<8x128xi1>
    %18 = arith.andi %17, %16 : vector<8x128xi1>
    %19 = math.log %5 : vector<8x128xf32>
    %20 = math.log %6 : vector<8x128xf32>
    %21 = arith.subf %19, %20 : vector<8x128xf32>
    %cst_7 = arith.constant 0.000000e+00 : f32
    %22 = vector.broadcast %cst_7 : f32 to vector<8x128xf32>
    %23 = arith.select %18, %21, %22 : vector<8x128xi1>, vector<8x128xf32>
    %24 = vector.shape_cast %23 : vector<8x128xf32> to vector<1x8x128xf32>
    %cst_8 = arith.constant dense<0.000000e+00> : vector<8x128xf32>
    %25 = vector.multi_reduction <add>, %24, %cst_8 [0] : vector<1x8x128xf32> to vector<8x128xf32>
    %c0_9 = arith.constant 0 : index
    %c0_10 = arith.constant 0 : index
    %26 = vector.load %arg4[%c0_9, %c0_10] : memref<8x128xf32, #tpu.memory_space<vmem>>, vector<8x128xf32>
    tpu.vector_store %arg4[%c0_9, %c0_10], %25 {strides = array<i32>} : memref<8x128xf32, #tpu.memory_space<vmem>>, vector<8x128xf32>,
    return
  }
  func.func @transform_0(%arg0: i32) -> (i32, i32) {
    %c0_i32 = arith.constant 0 : i32
    %c0_i32_0 = arith.constant 0 : i32
    return %arg0, %c0_i32 : i32, i32
  }
  func.func @transform_1(%arg0: i32) -> (i32, i32) {
    %c0_i32 = arith.constant 0 : i32
    %c0_i32_0 = arith.constant 0 : i32
    return %arg0, %c0_i32 : i32, i32
  }
  func.func @transform_2(%arg0: i32) -> (i32, i32) {
    %c0_i32 = arith.constant 0 : i32
    %c0_i32_0 = arith.constant 0 : i32
    %c0_i32_1 = arith.constant 0 : i32
    return %c0_i32, %c0_i32_0 : i32, i32
  }
  func.func @transform_3(%arg0: i32) -> (i32, i32) {
    %c0_i32 = arith.constant 0 : i32
    %c0_i32_0 = arith.constant 0 : i32
    return %arg0, %c0_i32 : i32, i32
  }
}

</mosaic_0001>

<llo_original>
// kernel: tpu_custom_call.1
$region0: #{tpu_custom_call.1}
  #allocation0 [shape = 'u32[]', space=smem, size = 0x4, offset = 0x4, fixed_abs, tag = 'smem constant byte address 0x4 - core index']
  #allocation1 [shape = 'u32[144,128]{1,0:T(1,128)}', space=vmem, size = 0x12000, scoped, tag = 'internal scratch']
  %s0 = inlined_call_operand.hbm [shape: f32[8,128], index: 0, kind: input, shape index: {}]
  %s1 = inlined_call_operand.hbm [shape: f32[8,128], index: 1, kind: input, shape index: {}]
  %s2 = inlined_call_operand.hbm [shape: f32[128,128], index: 2, kind: input, shape index: {}]
  %s3 = inlined_call_operand.hbm [shape: f32[8,128], index: 3, kind: output, shape index: {}]
  %s4 = sld [smem:[#allocation0]]
  $region34: #{tpu_custom_call.1} parent=0
    _
  %s6 = ssub.s32 1, %s4
  %s7 = scalar_select 0, %s6, %s4
  $region1: #{tpu_custom_call.1} parent=0
    #allocation2 [shape = 'u8[4096]{0}', space=vmem, size = 0x1000, scoped, tag = 'input window, operand 0, single buffered']
    #allocation3 [shape = 's32[1]{0}', space=sflag, size = 0x4, scoped, tag = 'scoped memory for tpu_custom_call.1']
    #allocation4 [shape = 's32[1]{0}', space=sflag, size = 0x4, scoped, tag = 'scoped memory for tpu_custom_call.1']
    #allocation5 [shape = 'u8[4096]{0}', space=vmem, size = 0x1000, scoped, tag = 'input window, operand 1, single buffered']
    #allocation6 [shape = 's32[1]{0}', space=sflag, size = 0x4, scoped, tag = 'scoped memory for tpu_custom_call.1']
    #allocation7 [shape = 'u8[65536]{0}', space=vmem, size = 0x10000, scoped, tag = 'input window, operand 2, single buffered']
    #allocation8 [shape = 'u8[4096]{0}', space=vmem, size = 0x1000, scoped, tag = 'output window, operand 0, single buffered']
    %8 = vsyncpa [#allocation3], 0
    %9 = vsyncpa [#allocation6], 0
    %10 = vsyncpa [#allocation4], 0
    // Predicated region
    $region2: #{tpu_custom_call.1} parent=1 // pred_check
      _
    $region3: #{tpu_custom_call.1} parent=1 // pred_check_branch
      %12 = sbr.rel (0) target = $region5
    $region4: #{tpu_custom_call.1} parent=1 // pred_region
      %s14 = ssub.s32 128, 128
      %15 = vsyncadd [#allocation3], %s14
      %s17 = sshll.u32 [#allocation2], 4
      %s18 = int_to_ptr.vmem [resolvable:$true] %s17
      %20 = dma.hbm_to_vmem [thread:$0]  %s0, 128, %s18, [#allocation3]
    $region5: #{tpu_custom_call.1} parent=1 // pred_fallthru
      _
    // Predicated region
    $region6: #{tpu_custom_call.1} parent=1 // pred_check
      _
    $region7: #{tpu_custom_call.1} parent=1 // pred_check_branch
      %22 = sbr.rel (0) target = $region9
    $region8: #{tpu_custom_call.1} parent=1 // pred_region
      %s24 = ssub.s32 128, 128
      %25 = vsyncadd [#allocation6], %s24
      %s27 = sshll.u32 [#allocation5], 4
      %s28 = int_to_ptr.vmem [resolvable:$true] %s27
      %30 = dma.hbm_to_vmem [thread:$0]  %s1, 128, %s28, [#allocation6]
    $region9: #{tpu_custom_call.1} parent=1 // pred_fallthru
      _
    // Predicated region
    $region10: #{tpu_custom_call.1} parent=1 // pred_check
      _
    $region11: #{tpu_custom_call.1} parent=1 // pred_check_branch
      %32 = sbr.rel (0) target = $region13
    $region12: #{tpu_custom_call.1} parent=1 // pred_region
      %s34 = ssub.s32 2048, 2048
      %35 = vsyncadd [#allocation6], %s34
      %s36 = sshll.u32 [#allocation7], 4
      %s37 = int_to_ptr.vmem [resolvable:$true] %s36
      %42 = dma.hbm_to_vmem [thread:$0]  %s2, 2048, %s37, [#allocation6], 128, 128, 8
    $region13: #{tpu_custom_call.1} parent=1 // pred_fallthru
      _
    // Predicated region
    $region14: #{tpu_custom_call.1} parent=1 // pred_check
      _
    $region15: #{tpu_custom_call.1} parent=1 // pred_check_branch
      %44 = sbr.rel (0) target = $region17
    $region16: #{tpu_custom_call.1} parent=1 // pred_region
      %45 = dma.done [#allocation3], 128
    $region17: #{tpu_custom_call.1} parent=1 // pred_fallthru
      _
    // Predicated region
    $region18: #{tpu_custom_call.1} parent=1 // pred_check
      _
    $region19: #{tpu_custom_call.1} parent=1 // pred_check_branch
      %47 = sbr.rel (0) target = $region21
    $region20: #{tpu_custom_call.1} parent=1 // pred_region
      %48 = dma.done [#allocation6], 128
    $region21: #{tpu_custom_call.1} parent=1 // pred_fallthru
      _
    // Predicated region
    $region22: #{tpu_custom_call.1} parent=1 // pred_check
      _
    $region23: #{tpu_custom_call.1} parent=1 // pred_check_branch
      %50 = sbr.rel (0) target = $region25
    $region24: #{tpu_custom_call.1} parent=1 // pred_region
      %51 = dma.done [#allocation6], 2048
    $region25: #{tpu_custom_call.1} parent=1 // pred_fallthru
      _
    %v52 = vld [vmem:[#allocation2] sm:$0xff]
    %v53 = vld [vmem:[#allocation5] sm:$0xff]
    %v54 = vmax.f32 %v52, %v53
    %v55 = vmin.f32 %v52, %v53
    %v56 = vld [vmem:[#allocation7] sm:$0xff]
    %v57 = vld [vmem:[#allocation7 + $0x8] sm:$0xff]
    %v58 = vld [vmem:[#allocation7 + $0x10] sm:$0xff]
    %v59 = vld [vmem:[#allocation7 + $0x18] sm:$0xff]
    %v60 = vld [vmem:[#allocation7 + $0x20] sm:$0xff]
    %v61 = vld [vmem:[#allocation7 + $0x28] sm:$0xff]
    %v62 = vld [vmem:[#allocation7 + $0x30] sm:$0xff]
    %v63 = vld [vmem:[#allocation7 + $0x38] sm:$0xff]
    %v64 = vld [vmem:[#allocation7 + $0x40] sm:$0xff]
    %v65 = vld [vmem:[#allocation7 + $0x48] sm:$0xff]
    %v66 = vld [vmem:[#allocation7 + $0x50] sm:$0xff]
    %v67 = vld [vmem:[#allocation7 + $0x58] sm:$0xff]
    %v68 = vld [vmem:[#allocation7 + $0x60] sm:$0xff]
    %v69 = vld [vmem:[#allocation7 + $0x68] sm:$0xff]
    %v70 = vld [vmem:[#allocation7 + $0x70] sm:$0xff]
    %v71 = vld [vmem:[#allocation7 + $0x78] sm:$0xff]
    %72 = vmatprep.subr.mxu0 0.0
    %v73 = vand.u32 %v71, 4294901760
    %74 = vmatpush1.msra.mxu0 %v73
    %75 = vmatprep.subr.mxu0 0.0
    %v76 = vand.u32 %v70, 4294901760
    %77 = vmatpush1.msra.mxu0 %v76
    %78 = vmatprep.subr.mxu0 0.0
    %v79 = vand.u32 %v69, 4294901760
    %80 = vmatpush1.msra.mxu0 %v79
    %81 = vmatprep.subr.mxu0 0.0
    %v82 = vand.u32 %v68, 4294901760
    %83 = vmatpush1.msra.mxu0 %v82
    %84 = vmatprep.subr.mxu0 0.0
    %v85 = vand.u32 %v67, 4294901760
    %86 = vmatpush1.msra.mxu0 %v85
    %87 = vmatprep.subr.mxu0 0.0
    %v88 = vand.u32 %v66, 4294901760
    %89 = vmatpush1.msra.mxu0 %v88
    %90 = vmatprep.subr.mxu0 0.0
    %v91 = vand.u32 %v65, 4294901760
    %92 = vmatpush1.msra.mxu0 %v91
    %93 = vmatprep.subr.mxu0 0.0
    %v94 = vand.u32 %v64, 4294901760
    %95 = vmatpush1.msra.mxu0 %v94
    %96 = vmatprep.subr.mxu0 0.0
    %v97 = vand.u32 %v63, 4294901760
    %98 = vmatpush1.msra.mxu0 %v97
    %99 = vmatprep.subr.mxu0 0.0
    %v100 = vand.u32 %v62, 4294901760
    %101 = vmatpush1.msra.mxu0 %v100
    %102 = vmatprep.subr.mxu0 0.0
    %v103 = vand.u32 %v61, 4294901760
    %104 = vmatpush1.msra.mxu0 %v103
    %105 = vmatprep.subr.mxu0 0.0
    %v106 = vand.u32 %v60, 4294901760
    %107 = vmatpush1.msra.mxu0 %v106
    %108 = vmatprep.subr.mxu0 0.0
    %v109 = vand.u32 %v59, 4294901760
    %110 = vmatpush1.msra.mxu0 %v109
    %111 = vmatprep.subr.mxu0 0.0
    %v112 = vand.u32 %v58, 4294901760
    %113 = vmatpush1.msra.mxu0 %v112
    %114 = vmatprep.subr.mxu0 0.0
    %v115 = vand.u32 %v57, 4294901760
    %116 = vmatpush1.msra.mxu0 %v115
    %117 = vmatprep.subr.mxu0 0.0
    %v118 = vand.u32 %v56, 4294901760
    %119 = vmatpush1.msra.mxu0 %v118
    %120 = vmatprep.subr.mxu0 0.0
    %121 = vmatpush2.msra.mxu0 0.0
    %122 = vmatprep.subr.mxu0 0.0
    %123 = vmatpush2.msra.mxu0 0.0
    %124 = vmatprep.subr.mxu0 0.0
    %125 = vmatpush2.msra.mxu0 0.0
    %126 = vmatprep.subr.mxu0 0.0
    %127 = vmatpush2.msra.mxu0 0.0
    %128 = vmatprep.subr.mxu0 0.0
    %129 = vmatpush2.msra.mxu0 0.0
    %130 = vmatprep.subr.mxu0 0.0
    %131 = vmatpush2.msra.mxu0 0.0
    %132 = vmatprep.subr.mxu0 0.0
    %133 = vmatpush2.msra.mxu0 0.0
    %134 = vmatprep.subr.mxu0 0.0
    %135 = vmatpush2.msra.mxu0 0.0
    %136 = vmatprep.subr.mxu0 0.0
    %137 = vmatpush2.msra.mxu0 0.0
    %138 = vmatprep.subr.mxu0 0.0
    %139 = vmatpush2.msra.mxu0 0.0
    %140 = vmatprep.subr.mxu0 0.0
    %141 = vmatpush2.msra.mxu0 0.0
    %142 = vmatprep.subr.mxu0 0.0
    %143 = vmatpush2.msra.mxu0 0.0
    %144 = vmatprep.subr.mxu0 0.0
    %145 = vmatpush2.msra.mxu0 0.0
    %146 = vmatprep.subr.mxu0 0.0
    %147 = vmatpush2.msra.mxu0 0.0
    %148 = vmatprep.subr.mxu0 0.0
    %149 = vmatpush2.msra.mxu0 0.0
    %150 = vmatprep.subr.mxu0 0.0
    %151 = vmatpush2.msra.mxu0 0.0
    %152 = vmatprep.mubr.f32.mxu0 0.0
    %v153 = vand.u32 %v54, 4294901760
    %v154 = vsub.f32 %v54, %v153
    %v155 = vand.u32 %v154, 4294901760
    %v156 = vsub.f32 %v154, %v155
    %v157 = vand.u32 %v156, 4294901760
    %158 = vmatmul.mubr.f32.gmra.mxu0 %v157
    %v159 = vpop.f32.mrf.mxu0
    %v160 = vadd.f32 0.0, %v159
    %v161 = vpop.f32.mrf.mxu0
    %162 = vdwg.mxu0
    %163 = vmatprep.subr.mxu0 0.0
    %v164 = vand.u32 %v71, 4294901760
    %v165 = vsub.f32 %v71, %v164
    %v166 = vand.u32 %v165, 4294901760
    %v167 = vsub.f32 %v165, %v166
    %v168 = vand.u32 %v167, 4294901760
    %169 = vmatpush1.msra.mxu0 %v168
    %170 = vmatprep.subr.mxu0 0.0
    %v171 = vand.u32 %v70, 4294901760
    %v172 = vsub.f32 %v70, %v171
    %v173 = vand.u32 %v172, 4294901760
    %v174 = vsub.f32 %v172, %v173
    %v175 = vand.u32 %v174, 4294901760
    %176 = vmatpush1.msra.mxu0 %v175
    %177 = vmatprep.subr.mxu0 0.0
    %v178 = vand.u32 %v69, 4294901760
    %v179 = vsub.f32 %v69, %v178
    %v180 = vand.u32 %v179, 4294901760
    %v181 = vsub.f32 %v179, %v180
    %v182 = vand.u32 %v181, 4294901760
    %183 = vmatpush1.msra.mxu0 %v182
    %184 = vmatprep.subr.mxu0 0.0
    %v185 = vand.u32 %v68, 4294901760
    %v186 = vsub.f32 %v68, %v185
    %v187 = vand.u32 %v186, 4294901760
    %v188 = vsub.f32 %v186, %v187
    %v189 = vand.u32 %v188, 4294901760
    %190 = vmatpush1.msra.mxu0 %v189
    %191 = vmatprep.subr.mxu0 0.0
    %v192 = vand.u32 %v67, 4294901760
    %v193 = vsub.f32 %v67, %v192
    %v194 = vand.u32 %v193, 4294901760
    %v195 = vsub.f32 %v193, %v194
    %v196 = vand.u32 %v195, 4294901760
    %197 = vmatpush1.msra.mxu0 %v196
    %198 = vmatprep.subr.mxu0 0.0
    %v199 = vand.u32 %v66, 4294901760
    %v200 = vsub.f32 %v66, %v199
    %v201 = vand.u32 %v200, 4294901760
    %v202 = vsub.f32 %v200, %v201
    %v203 = vand.u32 %v202, 4294901760
    %204 = vmatpush1.msra.mxu0 %v203
    %205 = vmatprep.subr.mxu0 0.0
    %v206 = vand.u32 %v65, 4294901760
    %v207 = vsub.f32 %v65, %v206
    %v208 = vand.u32 %v207, 4294901760
    %v209 = vsub.f32 %v207, %v208
    %v210 = vand.u32 %v209, 4294901760
    %211 = vmatpush1.msra.mxu0 %v210
    %212 = vmatprep.subr.mxu0 0.0
    %v213 = vand.u32 %v64, 4294901760
    %v214 = vsub.f32 %v64, %v213
    %v215 = vand.u32 %v214, 4294901760
    %v216 = vsub.f32 %v214, %v215
    %v217 = vand.u32 %v216, 4294901760
    %218 = vmatpush1.msra.mxu0 %v217
    %219 = vmatprep.subr.mxu0 0.0
    %v220 = vand.u32 %v63, 4294901760
    %v221 = vsub.f32 %v63, %v220
    %v222 = vand.u32 %v221, 4294901760
    %v223 = vsub.f32 %v221, %v222
    %v224 = vand.u32 %v223, 4294901760
    %225 = vmatpush1.msra.mxu0 %v224
    %226 = vmatprep.subr.mxu0 0.0
    %v227 = vand.u32 %v62, 4294901760
    %v228 = vsub.f32 %v62, %v227
    %v229 = vand.u32 %v228, 4294901760
    %v230 = vsub.f32 %v228, %v229
    %v231 = vand.u32 %v230, 4294901760
    %232 = vmatpush1.msra.mxu0 %v231
    %233 = vmatprep.subr.mxu0 0.0
    %v234 = vand.u32 %v61, 4294901760
    %v235 = vsub.f32 %v61, %v234
    %v236 = vand.u32 %v235, 4294901760
    %v237 = vsub.f32 %v235, %v236
    %v238 = vand.u32 %v237, 4294901760
    %239 = vmatpush1.msra.mxu0 %v238
    %240 = vmatprep.subr.mxu0 0.0
    %v241 = vand.u32 %v60, 4294901760
    %v242 = vsub.f32 %v60, %v241
    %v243 = vand.u32 %v242, 4294901760
    %v244 = vsub.f32 %v242, %v243
    %v245 = vand.u32 %v244, 4294901760
    %246 = vmatpush1.msra.mxu0 %v245
    %247 = vmatprep.subr.mxu0 0.0
    %v248 = vand.u32 %v59, 4294901760
    %v249 = vsub.f32 %v59, %v248
    %v250 = vand.u32 %v249, 4294901760
    %v251 = vsub.f32 %v249, %v250
    %v252 = vand.u32 %v251, 4294901760
    %253 = vmatpush1.msra.mxu0 %v252
    %254 = vmatprep.subr.mxu0 0.0
    %v255 = vand.u32 %v58, 4294901760
    %v256 = vsub.f32 %v58, %v255
    %v257 = vand.u32 %v256, 4294901760
    %v258 = vsub.f32 %v256, %v257
    %v259 = vand.u32 %v258, 4294901760
    %260 = vmatpush1.msra.mxu0 %v259
    %261 = vmatprep.subr.mxu0 0.0
    %v262 = vand.u32 %v57, 4294901760
    %v263 = vsub.f32 %v57, %v262
    %v264 = vand.u32 %v263, 4294901760
    %v265 = vsub.f32 %v263, %v264
    %v266 = vand.u32 %v265, 4294901760
    %267 = vmatpush1.msra.mxu0 %v266
    %268 = vmatprep.subr.mxu0 0.0
    %v269 = vand.u32 %v56, 4294901760
    %v270 = vsub.f32 %v56, %v269
    %v271 = vand.u32 %v270, 4294901760
    %v272 = vsub.f32 %v270, %v271
    %v273 = vand.u32 %v272, 4294901760
    %274 = vmatpush1.msra.mxu0 %v273
    %275 = vmatprep.subr.mxu0 0.0
    %276 = vmatpush2.msra.mxu0 0.0
    %277 = vmatprep.subr.mxu0 0.0
    %278 = vmatpush2.msra.mxu0 0.0
    %279 = vmatprep.subr.mxu0 0.0
    %280 = vmatpush2.msra.mxu0 0.0
    %281 = vmatprep.subr.mxu0 0.0
    %282 = vmatpush2.msra.mxu0 0.0
    %283 = vmatprep.subr.mxu0 0.0
    %284 = vmatpush2.msra.mxu0 0.0
    %285 = vmatprep.subr.mxu0 0.0
    %286 = vmatpush2.msra.mxu0 0.0
    %287 = vmatprep.subr.mxu0 0.0
    %288 = vmatpush2.msra.mxu0 0.0
    %289 = vmatprep.subr.mxu0 0.0
    %290 = vmatpush2.msra.mxu0 0.0
    %291 = vmatprep.subr.mxu0 0.0
    %292 = vmatpush2.msra.mxu0 0.0
    %293 = vmatprep.subr.mxu0 0.0
    %294 = vmatpush2.msra.mxu0 0.0
    %295 = vmatprep.subr.mxu0 0.0
    %296 = vmatpush2.msra.mxu0 0.0
    %297 = vmatprep.subr.mxu0 0.0
    %298 = vmatpush2.msra.mxu0 0.0
    %299 = vmatprep.subr.mxu0 0.0
    %300 = vmatpush2.msra.mxu0 0.0
    %301 = vmatprep.subr.mxu0 0.0
    %302 = vmatpush2.msra.mxu0 0.0
    %303 = vmatprep.subr.mxu0 0.0
    %304 = vmatpush2.msra.mxu0 0.0
    %305 = vmatprep.subr.mxu0 0.0
    %306 = vmatpush2.msra.mxu0 0.0
    %307 = vmatprep.mubr.f32.mxu0 0.0
    %v308 = vand.u32 %v54, 4294901760
    %309 = vmatmul.mubr.f32.gmra.mxu0 %v308
    %v310 = vpop.f32.mrf.mxu0
    %v311 = vadd.f32 %v160, %v310
    %v312 = vpop.f32.mrf.mxu0
    %313 = vdwg.mxu0
    %314 = vmatprep.subr.mxu0 0.0
    %v315 = vand.u32 %v71, 4294901760
    %v316 = vsub.f32 %v71, %v315
    %317 = vmatpush1.msra.mxu0 %v316
    %318 = vmatprep.subr.mxu0 0.0
    %v319 = vand.u32 %v70, 4294901760
    %v320 = vsub.f32 %v70, %v319
    %321 = vmatpush1.msra.mxu0 %v320
    %322 = vmatprep.subr.mxu0 0.0
    %v323 = vand.u32 %v69, 4294901760
    %v324 = vsub.f32 %v69, %v323
    %325 = vmatpush1.msra.mxu0 %v324
    %326 = vmatprep.subr.mxu0 0.0
    %v327 = vand.u32 %v68, 4294901760
    %v328 = vsub.f32 %v68, %v327
    %329 = vmatpush1.msra.mxu0 %v328
    %330 = vmatprep.subr.mxu0 0.0
    %v331 = vand.u32 %v67, 4294901760
    %v332 = vsub.f32 %v67, %v331
    %333 = vmatpush1.msra.mxu0 %v332
    %334 = vmatprep.subr.mxu0 0.0
    %v335 = vand.u32 %v66, 4294901760
    %v336 = vsub.f32 %v66, %v335
    %337 = vmatpush1.msra.mxu0 %v336
    %338 = vmatprep.subr.mxu0 0.0
    %v339 = vand.u32 %v65, 4294901760
    %v340 = vsub.f32 %v65, %v339
    %341 = vmatpush1.msra.mxu0 %v340
    %342 = vmatprep.subr.mxu0 0.0
    %v343 = vand.u32 %v64, 4294901760
    %v344 = vsub.f32 %v64, %v343
    %345 = vmatpush1.msra.mxu0 %v344
    %346 = vmatprep.subr.mxu0 0.0
    %v347 = vand.u32 %v63, 4294901760
    %v348 = vsub.f32 %v63, %v347
    %349 = vmatpush1.msra.mxu0 %v348
    %350 = vmatprep.subr.mxu0 0.0
    %v351 = vand.u32 %v62, 4294901760
    %v352 = vsub.f32 %v62, %v351
    %353 = vmatpush1.msra.mxu0 %v352
    %354 = vmatprep.subr.mxu0 0.0
    %v355 = vand.u32 %v61, 4294901760
    %v356 = vsub.f32 %v61, %v355
    %357 = vmatpush1.msra.mxu0 %v356
    %358 = vmatprep.subr.mxu0 0.0
    %v359 = vand.u32 %v60, 4294901760
    %v360 = vsub.f32 %v60, %v359
    %361 = vmatpush1.msra.mxu0 %v360
    %362 = vmatprep.subr.mxu0 0.0
    %v363 = vand.u32 %v59, 4294901760
    %v364 = vsub.f32 %v59, %v363
    %365 = vmatpush1.msra.mxu0 %v364
    %366 = vmatprep.subr.mxu0 0.0
    %v367 = vand.u32 %v58, 4294901760
    %v368 = vsub.f32 %v58, %v367
    %369 = vmatpush1.msra.mxu0 %v368
    %370 = vmatprep.subr.mxu0 0.0
    %v371 = vand.u32 %v57, 4294901760
    %v372 = vsub.f32 %v57, %v371
    %373 = vmatpush1.msra.mxu0 %v372
    %374 = vmatprep.subr.mxu0 0.0
    %v375 = vand.u32 %v56, 4294901760
    %v376 = vsub.f32 %v56, %v375
    %377 = vmatpush1.msra.mxu0 %v376
    %378 = vmatprep.subr.mxu0 0.0
    %379 = vmatpush2.msra.mxu0 0.0
    %380 = vmatprep.subr.mxu0 0.0
    %381 = vmatpush2.msra.mxu0 0.0
    %382 = vmatprep.subr.mxu0 0.0
    %383 = vmatpush2.msra.mxu0 0.0
    %384 = vmatprep.subr.mxu0 0.0
    %385 = vmatpush2.msra.mxu0 0.0
    %386 = vmatprep.subr.mxu0 0.0
    %387 = vmatpush2.msra.mxu0 0.0
    %388 = vmatprep.subr.mxu0 0.0
    %389 = vmatpush2.msra.mxu0 0.0
    %390 = vmatprep.subr.mxu0 0.0
    %391 = vmatpush2.msra.mxu0 0.0
    %392 = vmatprep.subr.mxu0 0.0
    %393 = vmatpush2.msra.mxu0 0.0
    %394 = vmatprep.subr.mxu0 0.0
    %395 = vmatpush2.msra.mxu0 0.0
    %396 = vmatprep.subr.mxu0 0.0
    %397 = vmatpush2.msra.mxu0 0.0
    %398 = vmatprep.subr.mxu0 0.0
    %399 = vmatpush2.msra.mxu0 0.0
    %400 = vmatprep.subr.mxu0 0.0
    %401 = vmatpush2.msra.mxu0 0.0
    %402 = vmatprep.subr.mxu0 0.0
    %403 = vmatpush2.msra.mxu0 0.0
    %404 = vmatprep.subr.mxu0 0.0
    %405 = vmatpush2.msra.mxu0 0.0
    %406 = vmatprep.subr.mxu0 0.0
    %407 = vmatpush2.msra.mxu0 0.0
    %408 = vmatprep.subr.mxu0 0.0
    %409 = vmatpush2.msra.mxu0 0.0
    %410 = vmatprep.mubr.f32.mxu0 0.0
    %v411 = vand.u32 %v54, 4294901760
    %v412 = vsub.f32 %v54, %v411
    %413 = vmatmul.mubr.f32.gmra.mxu0 %v412
    %v414 = vpop.f32.mrf.mxu0
    %v415 = vadd.f32 %v311, %v414
    %v416 = vpop.f32.mrf.mxu0
    %417 = vdwg.mxu0
    %418 = vmatprep.subr.mxu0 0.0
    %v419 = vand.u32 %v71, 4294901760
    %420 = vmatpush1.msra.mxu0 %v419
    %421 = vmatprep.subr.mxu0 0.0
    %v422 = vand.u32 %v70, 4294901760
    %423 = vmatpush1.msra.mxu0 %v422
    %424 = vmatprep.subr.mxu0 0.0
    %v425 = vand.u32 %v69, 4294901760
    %426 = vmatpush1.msra.mxu0 %v425
    %427 = vmatprep.subr.mxu0 0.0
    %v428 = vand.u32 %v68, 4294901760
    %429 = vmatpush1.msra.mxu0 %v428
    %430 = vmatprep.subr.mxu0 0.0
    %v431 = vand.u32 %v67, 4294901760
    %432 = vmatpush1.msra.mxu0 %v431
    %433 = vmatprep.subr.mxu0 0.0
    %v434 = vand.u32 %v66, 4294901760
    %435 = vmatpush1.msra.mxu0 %v434
    %436 = vmatprep.subr.mxu0 0.0
    %v437 = vand.u32 %v65, 4294901760
    %438 = vmatpush1.msra.mxu0 %v437
    %439 = vmatprep.subr.mxu0 0.0
    %v440 = vand.u32 %v64, 4294901760
    %441 = vmatpush1.msra.mxu0 %v440
    %442 = vmatprep.subr.mxu0 0.0
    %v443 = vand.u32 %v63, 4294901760
    %444 = vmatpush1.msra.mxu0 %v443
    %445 = vmatprep.subr.mxu0 0.0
    %v446 = vand.u32 %v62, 4294901760
    %447 = vmatpush1.msra.mxu0 %v446
    %448 = vmatprep.subr.mxu0 0.0
    %v449 = vand.u32 %v61, 4294901760
    %450 = vmatpush1.msra.mxu0 %v449
    %451 = vmatprep.subr.mxu0 0.0
    %v452 = vand.u32 %v60, 4294901760
    %453 = vmatpush1.msra.mxu0 %v452
    %454 = vmatprep.subr.mxu0 0.0
    %v455 = vand.u32 %v59, 4294901760
    %456 = vmatpush1.msra.mxu0 %v455
    %457 = vmatprep.subr.mxu0 0.0
    %v458 = vand.u32 %v58, 4294901760
    %459 = vmatpush1.msra.mxu0 %v458
    %460 = vmatprep.subr.mxu0 0.0
    %v461 = vand.u32 %v57, 4294901760
    %462 = vmatpush1.msra.mxu0 %v461
    %463 = vmatprep.subr.mxu0 0.0
    %v464 = vand.u32 %v56, 4294901760
    %465 = vmatpush1.msra.mxu0 %v464
    %466 = vmatprep.subr.mxu0 0.0
    %467 = vmatpush2.msra.mxu0 0.0
    %468 = vmatprep.subr.mxu0 0.0
    %469 = vmatpush2.msra.mxu0 0.0
    %470 = vmatprep.subr.mxu0 0.0
    %471 = vmatpush2.msra.mxu0 0.0
    %472 = vmatprep.subr.mxu0 0.0
    %473 = vmatpush2.msra.mxu0 0.0
    %474 = vmatprep.subr.mxu0 0.0
    %475 = vmatpush2.msra.mxu0 0.0
    %476 = vmatprep.subr.mxu0 0.0
    %477 = vmatpush2.msra.mxu0 0.0
    %478 = vmatprep.subr.mxu0 0.0
    %479 = vmatpush2.msra.mxu0 0.0
    %480 = vmatprep.subr.mxu0 0.0
    %481 = vmatpush2.msra.mxu0 0.0
    %482 = vmatprep.subr.mxu0 0.0
    %483 = vmatpush2.msra.mxu0 0.0
    %484 = vmatprep.subr.mxu0 0.0
    %485 = vmatpush2.msra.mxu0 0.0
    %486 = vmatprep.subr.mxu0 0.0
    %487 = vmatpush2.msra.mxu0 0.0
    %488 = vmatprep.subr.mxu0 0.0
    %489 = vmatpush2.msra.mxu0 0.0
    %490 = vmatprep.subr.mxu0 0.0
    %491 = vmatpush2.msra.mxu0 0.0
    %492 = vmatprep.subr.mxu0 0.0
    %493 = vmatpush2.msra.mxu0 0.0
    %494 = vmatprep.subr.mxu0 0.0
    %495 = vmatpush2.msra.mxu0 0.0
    %496 = vmatprep.subr.mxu0 0.0
    %497 = vmatpush2.msra.mxu0 0.0
    %498 = vmatprep.mubr.f32.mxu0 0.0
    %v499 = vand.u32 %v54, 4294901760
    %v500 = vsub.f32 %v54, %v499
    %v501 = vand.u32 %v500, 4294901760
    %502 = vmatmul.mubr.f32.gmra.mxu0 %v501
    %v503 = vpop.f32.mrf.mxu0
    %v504 = vadd.f32 %v415, %v503
    %v505 = vpop.f32.mrf.mxu0
    %506 = vdwg.mxu0
    %507 = vmatprep.subr.mxu0 0.0
    %v508 = vand.u32 %v71, 4294901760
    %v509 = vsub.f32 %v71, %v508
    %v510 = vand.u32 %v509, 4294901760
    %511 = vmatpush1.msra.mxu0 %v510
    %512 = vmatprep.subr.mxu0 0.0
    %v513 = vand.u32 %v70, 4294901760
    %v514 = vsub.f32 %v70, %v513
    %v515 = vand.u32 %v514, 4294901760
    %516 = vmatpush1.msra.mxu0 %v515
    %517 = vmatprep.subr.mxu0 0.0
    %v518 = vand.u32 %v69, 4294901760
    %v519 = vsub.f32 %v69, %v518
    %v520 = vand.u32 %v519, 4294901760
    %521 = vmatpush1.msra.mxu0 %v520
    %522 = vmatprep.subr.mxu0 0.0
    %v523 = vand.u32 %v68, 4294901760
    %v524 = vsub.f32 %v68, %v523
    %v525 = vand.u32 %v524, 4294901760
    %526 = vmatpush1.msra.mxu0 %v525
    %527 = vmatprep.subr.mxu0 0.0
    %v528 = vand.u32 %v67, 4294901760
    %v529 = vsub.f32 %v67, %v528
    %v530 = vand.u32 %v529, 4294901760
    %531 = vmatpush1.msra.mxu0 %v530
    %532 = vmatprep.subr.mxu0 0.0
    %v533 = vand.u32 %v66, 4294901760
    %v534 = vsub.f32 %v66, %v533
    %v535 = vand.u32 %v534, 4294901760
    %536 = vmatpush1.msra.mxu0 %v535
    %537 = vmatprep.subr.mxu0 0.0
    %v538 = vand.u32 %v65, 4294901760
    %v539 = vsub.f32 %v65, %v538
    %v540 = vand.u32 %v539, 4294901760
    %541 = vmatpush1.msra.mxu0 %v540
    %542 = vmatprep.subr.mxu0 0.0
    %v543 = vand.u32 %v64, 4294901760
    %v544 = vsub.f32 %v64, %v543
    %v545 = vand.u32 %v544, 4294901760
    %546 = vmatpush1.msra.mxu0 %v545
    %547 = vmatprep.subr.mxu0 0.0
    %v548 = vand.u32 %v63, 4294901760
    %v549 = vsub.f32 %v63, %v548
    %v550 = vand.u32 %v549, 4294901760
    %551 = vmatpush1.msra.mxu0 %v550
    %552 = vmatprep.subr.mxu0 0.0
    %v553 = vand.u32 %v62, 4294901760
    %v554 = vsub.f32 %v62, %v553
    %v555 = vand.u32 %v554, 4294901760
    %556 = vmatpush1.msra.mxu0 %v555
    %557 = vmatprep.subr.mxu0 0.0
    %v558 = vand.u32 %v61, 4294901760
    %v559 = vsub.f32 %v61, %v558
    %v560 = vand.u32 %v559, 4294901760
    %561 = vmatpush1.msra.mxu0 %v560
    %562 = vmatprep.subr.mxu0 0.0
    %v563 = vand.u32 %v60, 4294901760
    %v564 = vsub.f32 %v60, %v563
    %v565 = vand.u32 %v564, 4294901760
    %566 = vmatpush1.msra.mxu0 %v565
    %567 = vmatprep.subr.mxu0 0.0
    %v568 = vand.u32 %v59, 4294901760
    %v569 = vsub.f32 %v59, %v568
    %v570 = vand.u32 %v569, 4294901760
    %571 = vmatpush1.msra.mxu0 %v570
    %572 = vmatprep.subr.mxu0 0.0
    %v573 = vand.u32 %v58, 4294901760
    %v574 = vsub.f32 %v58, %v573
    %v575 = vand.u32 %v574, 4294901760
    %576 = vmatpush1.msra.mxu0 %v575
    %577 = vmatprep.subr.mxu0 0.0
    %v578 = vand.u32 %v57, 4294901760
    %v579 = vsub.f32 %v57, %v578
    %v580 = vand.u32 %v579, 4294901760
    %581 = vmatpush1.msra.mxu0 %v580
    %582 = vmatprep.subr.mxu0 0.0
    %v583 = vand.u32 %v56, 4294901760
    %v584 = vsub.f32 %v56, %v583
    %v585 = vand.u32 %v584, 4294901760
    %586 = vmatpush1.msra.mxu0 %v585
    %587 = vmatprep.subr.mxu0 0.0
    %588 = vmatpush2.msra.mxu0 0.0
    %589 = vmatprep.subr.mxu0 0.0
    %590 = vmatpush2.msra.mxu0 0.0
    %591 = vmatprep.subr.mxu0 0.0
    %592 = vmatpush2.msra.mxu0 0.0
    %593 = vmatprep.subr.mxu0 0.0
    %594 = vmatpush2.msra.mxu0 0.0
    %595 = vmatprep.subr.mxu0 0.0
    %596 = vmatpush2.msra.mxu0 0.0
    %597 = vmatprep.subr.mxu0 0.0
    %598 = vmatpush2.msra.mxu0 0.0
    %599 = vmatprep.subr.mxu0 0.0
    %600 = vmatpush2.msra.mxu0 0.0
    %601 = vmatprep.subr.mxu0 0.0
    %602 = vmatpush2.msra.mxu0 0.0
    %603 = vmatprep.subr.mxu0 0.0
    %604 = vmatpush2.msra.mxu0 0.0
    %605 = vmatprep.subr.mxu0 0.0
    %606 = vmatpush2.msra.mxu0 0.0
    %607 = vmatprep.subr.mxu0 0.0
    %608 = vmatpush2.msra.mxu0 0.0
    %609 = vmatprep.subr.mxu0 0.0
    %610 = vmatpush2.msra.mxu0 0.0
    %611 = vmatprep.subr.mxu0 0.0
    %612 = vmatpush2.msra.mxu0 0.0
    %613 = vmatprep.subr.mxu0 0.0
    %614 = vmatpush2.msra.mxu0 0.0
    %615 = vmatprep.subr.mxu0 0.0
    %616 = vmatpush2.msra.mxu0 0.0
    %617 = vmatprep.subr.mxu0 0.0
    %618 = vmatpush2.msra.mxu0 0.0
    %619 = vmatprep.mubr.f32.mxu0 0.0
    %v620 = vand.u32 %v54, 4294901760
    %621 = vmatmul.mubr.f32.gmra.mxu0 %v620
    %v622 = vpop.f32.mrf.mxu0
    %v623 = vadd.f32 %v504, %v622
    %v624 = vpop.f32.mrf.mxu0
    %625 = vdwg.mxu0
    %626 = vmatprep.subr.mxu0 0.0
    %v627 = vand.u32 %v71, 4294901760
    %628 = vmatpush1.msra.mxu0 %v627
    %629 = vmatprep.subr.mxu0 0.0
    %v630 = vand.u32 %v70, 4294901760
    %631 = vmatpush1.msra.mxu0 %v630
    %632 = vmatprep.subr.mxu0 0.0
    %v633 = vand.u32 %v69, 4294901760
    %634 = vmatpush1.msra.mxu0 %v633
    %635 = vmatprep.subr.mxu0 0.0
    %v636 = vand.u32 %v68, 4294901760
    %637 = vmatpush1.msra.mxu0 %v636
    %638 = vmatprep.subr.mxu0 0.0
    %v639 = vand.u32 %v67, 4294901760
    %640 = vmatpush1.msra.mxu0 %v639
    %641 = vmatprep.subr.mxu0 0.0
    %v642 = vand.u32 %v66, 4294901760
    %643 = vmatpush1.msra.mxu0 %v642
    %644 = vmatprep.subr.mxu0 0.0
    %v645 = vand.u32 %v65, 4294901760
    %646 = vmatpush1.msra.mxu0 %v645
    %647 = vmatprep.subr.mxu0 0.0
    %v648 = vand.u32 %v64, 4294901760
    %649 = vmatpush1.msra.mxu0 %v648
    %650 = vmatprep.subr.mxu0 0.0
    %v651 = vand.u32 %v63, 4294901760
    %652 = vmatpush1.msra.mxu0 %v651
    %653 = vmatprep.subr.mxu0 0.0
    %v654 = vand.u32 %v62, 4294901760
    %655 = vmatpush1.msra.mxu0 %v654
    %656 = vmatprep.subr.mxu0 0.0
    %v657 = vand.u32 %v61, 4294901760
    %658 = vmatpush1.msra.mxu0 %v657
    %659 = vmatprep.subr.mxu0 0.0
    %v660 = vand.u32 %v60, 4294901760
    %661 = vmatpush1.msra.mxu0 %v660
    %662 = vmatprep.subr.mxu0 0.0
    %v663 = vand.u32 %v59, 4294901760
    %664 = vmatpush1.msra.mxu0 %v663
    %665 = vmatprep.subr.mxu0 0.0
    %v666 = vand.u32 %v58, 4294901760
    %667 = vmatpush1.msra.mxu0 %v666
    %668 = vmatprep.subr.mxu0 0.0
    %v669 = vand.u32 %v57, 4294901760
    %670 = vmatpush1.msra.mxu0 %v669
    %671 = vmatprep.subr.mxu0 0.0
    %v672 = vand.u32 %v56, 4294901760
    %673 = vmatpush1.msra.mxu0 %v672
    %674 = vmatprep.subr.mxu0 0.0
    %675 = vmatpush2.msra.mxu0 0.0
    %676 = vmatprep.subr.mxu0 0.0
    %677 = vmatpush2.msra.mxu0 0.0
    %678 = vmatprep.subr.mxu0 0.0
    %679 = vmatpush2.msra.mxu0 0.0
    %680 = vmatprep.subr.mxu0 0.0
    %681 = vmatpush2.msra.mxu0 0.0
    %682 = vmatprep.subr.mxu0 0.0
    %683 = vmatpush2.msra.mxu0 0.0
    %684 = vmatprep.subr.mxu0 0.0
    %685 = vmatpush2.msra.mxu0 0.0
    %686 = vmatprep.subr.mxu0 0.0
    %687 = vmatpush2.msra.mxu0 0.0
    %688 = vmatprep.subr.mxu0 0.0
    %689 = vmatpush2.msra.mxu0 0.0
    %690 = vmatprep.subr.mxu0 0.0
    %691 = vmatpush2.msra.mxu0 0.0
    %692 = vmatprep.subr.mxu0 0.0
    %693 = vmatpush2.msra.mxu0 0.0
    %694 = vmatprep.subr.mxu0 0.0
    %695 = vmatpush2.msra.mxu0 0.0
    %696 = vmatprep.subr.mxu0 0.0
    %697 = vmatpush2.msra.mxu0 0.0
    %698 = vmatprep.subr.mxu0 0.0
    %699 = vmatpush2.msra.mxu0 0.0
    %700 = vmatprep.subr.mxu0 0.0
    %701 = vmatpush2.msra.mxu0 0.0
    %702 = vmatprep.subr.mxu0 0.0
    %703 = vmatpush2.msra.mxu0 0.0
    %704 = vmatprep.subr.mxu0 0.0
    %705 = vmatpush2.msra.mxu0 0.0
    %706 = vmatprep.mubr.f32.mxu0 0.0
    %v707 = vand.u32 %v54, 4294901760
    %708 = vmatmul.mubr.f32.gmra.mxu0 %v707
    %v709 = vpop.f32.mrf.mxu0
    %v710 = vadd.f32 %v623, %v709
    %v711 = vpop.f32.mrf.mxu0
    %712 = vdwg.mxu0
    %713 = vmatprep.subr.mxu0 0.0
    %v714 = vand.u32 %v71, 4294901760
    %715 = vmatpush1.msra.mxu0 %v714
    %716 = vmatprep.subr.mxu0 0.0
    %v717 = vand.u32 %v70, 4294901760
    %718 = vmatpush1.msra.mxu0 %v717
    %719 = vmatprep.subr.mxu0 0.0
    %v720 = vand.u32 %v69, 4294901760
    %721 = vmatpush1.msra.mxu0 %v720
    %722 = vmatprep.subr.mxu0 0.0
    %v723 = vand.u32 %v68, 4294901760
    %724 = vmatpush1.msra.mxu0 %v723
    %725 = vmatprep.subr.mxu0 0.0
    %v726 = vand.u32 %v67, 4294901760
    %727 = vmatpush1.msra.mxu0 %v726
    %728 = vmatprep.subr.mxu0 0.0
    %v729 = vand.u32 %v66, 4294901760
    %730 = vmatpush1.msra.mxu0 %v729
    %731 = vmatprep.subr.mxu0 0.0
    %v732 = vand.u32 %v65, 4294901760
    %733 = vmatpush1.msra.mxu0 %v732
    %734 = vmatprep.subr.mxu0 0.0
    %v735 = vand.u32 %v64, 4294901760
    %736 = vmatpush1.msra.mxu0 %v735
    %737 = vmatprep.subr.mxu0 0.0
    %v738 = vand.u32 %v63, 4294901760
    %739 = vmatpush1.msra.mxu0 %v738
    %740 = vmatprep.subr.mxu0 0.0
    %v741 = vand.u32 %v62, 4294901760
    %742 = vmatpush1.msra.mxu0 %v741
    %743 = vmatprep.subr.mxu0 0.0
    %v744 = vand.u32 %v61, 4294901760
    %745 = vmatpush1.msra.mxu0 %v744
    %746 = vmatprep.subr.mxu0 0.0
    %v747 = vand.u32 %v60, 4294901760
    %748 = vmatpush1.msra.mxu0 %v747
    %749 = vmatprep.subr.mxu0 0.0
    %v750 = vand.u32 %v59, 4294901760
    %751 = vmatpush1.msra.mxu0 %v750
    %752 = vmatprep.subr.mxu0 0.0
    %v753 = vand.u32 %v58, 4294901760
    %754 = vmatpush1.msra.mxu0 %v753
    %755 = vmatprep.subr.mxu0 0.0
    %v756 = vand.u32 %v57, 4294901760
    %757 = vmatpush1.msra.mxu0 %v756
    %758 = vmatprep.subr.mxu0 0.0
    %v759 = vand.u32 %v56, 4294901760
    %760 = vmatpush1.msra.mxu0 %v759
    %761 = vmatprep.subr.mxu0 0.0
    %762 = vmatpush2.msra.mxu0 0.0
    %763 = vmatprep.subr.mxu0 0.0
    %764 = vmatpush2.msra.mxu0 0.0
    %765 = vmatprep.subr.mxu0 0.0
    %766 = vmatpush2.msra.mxu0 0.0
    %767 = vmatprep.subr.mxu0 0.0
    %768 = vmatpush2.msra.mxu0 0.0
    %769 = vmatprep.subr.mxu0 0.0
    %770 = vmatpush2.msra.mxu0 0.0
    %771 = vmatprep.subr.mxu0 0.0
    %772 = vmatpush2.msra.mxu0 0.0
    %773 = vmatprep.subr.mxu0 0.0
    %774 = vmatpush2.msra.mxu0 0.0
    %775 = vmatprep.subr.mxu0 0.0
    %776 = vmatpush2.msra.mxu0 0.0
    %777 = vmatprep.subr.mxu0 0.0
    %778 = vmatpush2.msra.mxu0 0.0
    %779 = vmatprep.subr.mxu0 0.0
    %780 = vmatpush2.msra.mxu0 0.0
    %781 = vmatprep.subr.mxu0 0.0
    %782 = vmatpush2.msra.mxu0 0.0
    %783 = vmatprep.subr.mxu0 0.0
    %784 = vmatpush2.msra.mxu0 0.0
    %785 = vmatprep.subr.mxu0 0.0
    %786 = vmatpush2.msra.mxu0 0.0
    %787 = vmatprep.subr.mxu0 0.0
    %788 = vmatpush2.msra.mxu0 0.0
    %789 = vmatprep.subr.mxu0 0.0
    %790 = vmatpush2.msra.mxu0 0.0
    %791 = vmatprep.subr.mxu0 0.0
    %792 = vmatpush2.msra.mxu0 0.0
    %793 = vmatprep.mubr.f32.mxu0 0.0
    %v794 = vand.u32 %v55, 4294901760
    %v795 = vsub.f32 %v55, %v794
    %v796 = vand.u32 %v795, 4294901760
    %v797 = vsub.f32 %v795, %v796
    %v798 = vand.u32 %v797, 4294901760
    %799 = vmatmul.mubr.f32.gmra.mxu0 %v798
    %v800 = vpop.f32.mrf.mxu0
    %v801 = vadd.f32 0.0, %v800
    %v802 = vpop.f32.mrf.mxu0
    %803 = vdwg.mxu0
    %804 = vmatprep.subr.mxu0 0.0
    %v805 = vand.u32 %v71, 4294901760
    %v806 = vsub.f32 %v71, %v805
    %v807 = vand.u32 %v806, 4294901760
    %v808 = vsub.f32 %v806, %v807
    %v809 = vand.u32 %v808, 4294901760
    %810 = vmatpush1.msra.mxu0 %v809
    %811 = vmatprep.subr.mxu0 0.0
    %v812 = vand.u32 %v70, 4294901760
    %v813 = vsub.f32 %v70, %v812
    %v814 = vand.u32 %v813, 4294901760
    %v815 = vsub.f32 %v813, %v814
    %v816 = vand.u32 %v815, 4294901760
    %817 = vmatpush1.msra.mxu0 %v816
    %818 = vmatprep.subr.mxu0 0.0
    %v819 = vand.u32 %v69, 4294901760
    %v820 = vsub.f32 %v69, %v819
    %v821 = vand.u32 %v820, 4294901760
    %v822 = vsub.f32 %v820, %v821
    %v823 = vand.u32 %v822, 4294901760
    %824 = vmatpush1.msra.mxu0 %v823
    %825 = vmatprep.subr.mxu0 0.0
    %v826 = vand.u32 %v68, 4294901760
    %v827 = vsub.f32 %v68, %v826
    %v828 = vand.u32 %v827, 4294901760
    %v829 = vsub.f32 %v827, %v828
    %v830 = vand.u32 %v829, 4294901760
    %831 = vmatpush1.msra.mxu0 %v830
    %832 = vmatprep.subr.mxu0 0.0
    %v833 = vand.u32 %v67, 4294901760
    %v834 = vsub.f32 %v67, %v833
    %v835 = vand.u32 %v834, 4294901760
    %v836 = vsub.f32 %v834, %v835
    %v837 = vand.u32 %v836, 4294901760
    %838 = vmatpush1.msra.mxu0 %v837
    %839 = vmatprep.subr.mxu0 0.0
    %v840 = vand.u32 %v66, 4294901760
    %v841 = vsub.f32 %v66, %v840
    %v842 = vand.u32 %v841, 4294901760
    %v843 = vsub.f32 %v841, %v842
    %v844 = vand.u32 %v843, 4294901760
    %845 = vmatpush1.msra.mxu0 %v844
    %846 = vmatprep.subr.mxu0 0.0
    %v847 = vand.u32 %v65, 4294901760
    %v848 = vsub.f32 %v65, %v847
    %v849 = vand.u32 %v848, 4294901760
    %v850 = vsub.f32 %v848, %v849
    %v851 = vand.u32 %v850, 4294901760
    %852 = vmatpush1.msra.mxu0 %v851
    %853 = vmatprep.subr.mxu0 0.0
    %v854 = vand.u32 %v64, 4294901760
    %v855 = vsub.f32 %v64, %v854
    %v856 = vand.u32 %v855, 4294901760
    %v857 = vsub.f32 %v855, %v856
    %v858 = vand.u32 %v857, 4294901760
    %859 = vmatpush1.msra.mxu0 %v858
    %860 = vmatprep.subr.mxu0 0.0
    %v861 = vand.u32 %v63, 4294901760
    %v862 = vsub.f32 %v63, %v861
    %v863 = vand.u32 %v862, 4294901760
    %v864 = vsub.f32 %v862, %v863
    %v865 = vand.u32 %v864, 4294901760
    %866 = vmatpush1.msra.mxu0 %v865
    %867 = vmatprep.subr.mxu0 0.0
    %v868 = vand.u32 %v62, 4294901760
    %v869 = vsub.f32 %v62, %v868
    %v870 = vand.u32 %v869, 4294901760
    %v871 = vsub.f32 %v869, %v870
    %v872 = vand.u32 %v871, 4294901760
    %873 = vmatpush1.msra.mxu0 %v872
    %874 = vmatprep.subr.mxu0 0.0
    %v875 = vand.u32 %v61, 4294901760
    %v876 = vsub.f32 %v61, %v875
    %v877 = vand.u32 %v876, 4294901760
    %v878 = vsub.f32 %v876, %v877
    %v879 = vand.u32 %v878, 4294901760
    %880 = vmatpush1.msra.mxu0 %v879
    %881 = vmatprep.subr.mxu0 0.0
    %v882 = vand.u32 %v60, 4294901760
    %v883 = vsub.f32 %v60, %v882
    %v884 = vand.u32 %v883, 4294901760
    %v885 = vsub.f32 %v883, %v884
    %v886 = vand.u32 %v885, 4294901760
    %887 = vmatpush1.msra.mxu0 %v886
    %888 = vmatprep.subr.mxu0 0.0
    %v889 = vand.u32 %v59, 4294901760
    %v890 = vsub.f32 %v59, %v889
    %v891 = vand.u32 %v890, 4294901760
    %v892 = vsub.f32 %v890, %v891
    %v893 = vand.u32 %v892, 4294901760
    %894 = vmatpush1.msra.mxu0 %v893
    %895 = vmatprep.subr.mxu0 0.0
    %v896 = vand.u32 %v58, 4294901760
    %v897 = vsub.f32 %v58, %v896
    %v898 = vand.u32 %v897, 4294901760
    %v899 = vsub.f32 %v897, %v898
    %v900 = vand.u32 %v899, 4294901760
    %901 = vmatpush1.msra.mxu0 %v900
    %902 = vmatprep.subr.mxu0 0.0
    %v903 = vand.u32 %v57, 4294901760
    %v904 = vsub.f32 %v57, %v903
    %v905 = vand.u32 %v904, 4294901760
    %v906 = vsub.f32 %v904, %v905
    %v907 = vand.u32 %v906, 4294901760
    %908 = vmatpush1.msra.mxu0 %v907
    %909 = vmatprep.subr.mxu0 0.0
    %v910 = vand.u32 %v56, 4294901760
    %v911 = vsub.f32 %v56, %v910
    %v912 = vand.u32 %v911, 4294901760
    %v913 = vsub.f32 %v911, %v912
    %v914 = vand.u32 %v913, 4294901760
    %915 = vmatpush1.msra.mxu0 %v914
    %916 = vmatprep.subr.mxu0 0.0
    %917 = vmatpush2.msra.mxu0 0.0
    %918 = vmatprep.subr.mxu0 0.0
    %919 = vmatpush2.msra.mxu0 0.0
    %920 = vmatprep.subr.mxu0 0.0
    %921 = vmatpush2.msra.mxu0 0.0
    %922 = vmatprep.subr.mxu0 0.0
    %923 = vmatpush2.msra.mxu0 0.0
    %924 = vmatprep.subr.mxu0 0.0
    %925 = vmatpush2.msra.mxu0 0.0
    %926 = vmatprep.subr.mxu0 0.0
    %927 = vmatpush2.msra.mxu0 0.0
    %928 = vmatprep.subr.mxu0 0.0
    %929 = vmatpush2.msra.mxu0 0.0
    %930 = vmatprep.subr.mxu0 0.0
    %931 = vmatpush2.msra.mxu0 0.0
    %932 = vmatprep.subr.mxu0 0.0
    %933 = vmatpush2.msra.mxu0 0.0
    %934 = vmatprep.subr.mxu0 0.0
    %935 = vmatpush2.msra.mxu0 0.0
    %936 = vmatprep.subr.mxu0 0.0
    %937 = vmatpush2.msra.mxu0 0.0
    %938 = vmatprep.subr.mxu0 0.0
    %939 = vmatpush2.msra.mxu0 0.0
    %940 = vmatprep.subr.mxu0 0.0
    %941 = vmatpush2.msra.mxu0 0.0
    %942 = vmatprep.subr.mxu0 0.0
    %943 = vmatpush2.msra.mxu0 0.0
    %944 = vmatprep.subr.mxu0 0.0
    %945 = vmatpush2.msra.mxu0 0.0
    %946 = vmatprep.subr.mxu0 0.0
    %947 = vmatpush2.msra.mxu0 0.0
    %948 = vmatprep.mubr.f32.mxu0 0.0
    %v949 = vand.u32 %v55, 4294901760
    %950 = vmatmul.mubr.f32.gmra.mxu0 %v949
    %v951 = vpop.f32.mrf.mxu0
    %v952 = vadd.f32 %v801, %v951
    %v953 = vpop.f32.mrf.mxu0
    %954 = vdwg.mxu0
    %955 = vmatprep.subr.mxu0 0.0
    %v956 = vand.u32 %v71, 4294901760
    %v957 = vsub.f32 %v71, %v956
    %958 = vmatpush1.msra.mxu0 %v957
    %959 = vmatprep.subr.mxu0 0.0
    %v960 = vand.u32 %v70, 4294901760
    %v961 = vsub.f32 %v70, %v960
    %962 = vmatpush1.msra.mxu0 %v961
    %963 = vmatprep.subr.mxu0 0.0
    %v964 = vand.u32 %v69, 4294901760
    %v965 = vsub.f32 %v69, %v964
    %966 = vmatpush1.msra.mxu0 %v965
    %967 = vmatprep.subr.mxu0 0.0
    %v968 = vand.u32 %v68, 4294901760
    %v969 = vsub.f32 %v68, %v968
    %970 = vmatpush1.msra.mxu0 %v969
    %971 = vmatprep.subr.mxu0 0.0
    %v972 = vand.u32 %v67, 4294901760
    %v973 = vsub.f32 %v67, %v972
    %974 = vmatpush1.msra.mxu0 %v973
    %975 = vmatprep.subr.mxu0 0.0
    %v976 = vand.u32 %v66, 4294901760
    %v977 = vsub.f32 %v66, %v976
    %978 = vmatpush1.msra.mxu0 %v977
    %979 = vmatprep.subr.mxu0 0.0
    %v980 = vand.u32 %v65, 4294901760
    %v981 = vsub.f32 %v65, %v980
    %982 = vmatpush1.msra.mxu0 %v981
    %983 = vmatprep.subr.mxu0 0.0
    %v984 = vand.u32 %v64, 4294901760
    %v985 = vsub.f32 %v64, %v984
    %986 = vmatpush1.msra.mxu0 %v985
    %987 = vmatprep.subr.mxu0 0.0
    %v988 = vand.u32 %v63, 4294901760
    %v989 = vsub.f32 %v63, %v988
    %990 = vmatpush1.msra.mxu0 %v989
    %991 = vmatprep.subr.mxu0 0.0
    %v992 = vand.u32 %v62, 4294901760
    %v993 = vsub.f32 %v62, %v992
    %994 = vmatpush1.msra.mxu0 %v993
    %995 = vmatprep.subr.mxu0 0.0
    %v996 = vand.u32 %v61, 4294901760
    %v997 = vsub.f32 %v61, %v996
    %998 = vmatpush1.msra.mxu0 %v997
    %999 = vmatprep.subr.mxu0 0.0
    %v1000 = vand.u32 %v60, 4294901760
    %v1001 = vsub.f32 %v60, %v1000
    %1002 = vmatpush1.msra.mxu0 %v1001
    %1003 = vmatprep.subr.mxu0 0.0
    %v1004 = vand.u32 %v59, 4294901760
    %v1005 = vsub.f32 %v59, %v1004
    %1006 = vmatpush1.msra.mxu0 %v1005
    %1007 = vmatprep.subr.mxu0 0.0
    %v1008 = vand.u32 %v58, 4294901760
    %v1009 = vsub.f32 %v58, %v1008
    %1010 = vmatpush1.msra.mxu0 %v1009
    %1011 = vmatprep.subr.mxu0 0.0
    %v1012 = vand.u32 %v57, 4294901760
    %v1013 = vsub.f32 %v57, %v1012
    %1014 = vmatpush1.msra.mxu0 %v1013
    %1015 = vmatprep.subr.mxu0 0.0
    %v1016 = vand.u32 %v56, 4294901760
    %v1017 = vsub.f32 %v56, %v1016
    %1018 = vmatpush1.msra.mxu0 %v1017
    %1019 = vmatprep.subr.mxu0 0.0
    %1020 = vmatpush2.msra.mxu0 0.0
    %1021 = vmatprep.subr.mxu0 0.0
    %1022 = vmatpush2.msra.mxu0 0.0
    %1023 = vmatprep.subr.mxu0 0.0
    %1024 = vmatpush2.msra.mxu0 0.0
    %1025 = vmatprep.subr.mxu0 0.0
    %1026 = vmatpush2.msra.mxu0 0.0
    %1027 = vmatprep.subr.mxu0 0.0
    %1028 = vmatpush2.msra.mxu0 0.0
    %1029 = vmatprep.subr.mxu0 0.0
    %1030 = vmatpush2.msra.mxu0 0.0
    %1031 = vmatprep.subr.mxu0 0.0
    %1032 = vmatpush2.msra.mxu0 0.0
    %1033 = vmatprep.subr.mxu0 0.0
    %1034 = vmatpush2.msra.mxu0 0.0
    %1035 = vmatprep.subr.mxu0 0.0
    %1036 = vmatpush2.msra.mxu0 0.0
    %1037 = vmatprep.subr.mxu0 0.0
    %1038 = vmatpush2.msra.mxu0 0.0
    %1039 = vmatprep.subr.mxu0 0.0
    %1040 = vmatpush2.msra.mxu0 0.0
    %1041 = vmatprep.subr.mxu0 0.0
    %1042 = vmatpush2.msra.mxu0 0.0
    %1043 = vmatprep.subr.mxu0 0.0
    %1044 = vmatpush2.msra.mxu0 0.0
    %1045 = vmatprep.subr.mxu0 0.0
    %1046 = vmatpush2.msra.mxu0 0.0
    %1047 = vmatprep.subr.mxu0 0.0
    %1048 = vmatpush2.msra.mxu0 0.0
    %1049 = vmatprep.subr.mxu0 0.0
    %1050 = vmatpush2.msra.mxu0 0.0
    %1051 = vmatprep.mubr.f32.mxu0 0.0
    %v1052 = vand.u32 %v55, 4294901760
    %v1053 = vsub.f32 %v55, %v1052
    %1054 = vmatmul.mubr.f32.gmra.mxu0 %v1053
    %v1055 = vpop.f32.mrf.mxu0
    %v1056 = vadd.f32 %v952, %v1055
    %v1057 = vpop.f32.mrf.mxu0
    %1058 = vdwg.mxu0
    %1059 = vmatprep.subr.mxu0 0.0
    %v1060 = vand.u32 %v71, 4294901760
    %1061 = vmatpush1.msra.mxu0 %v1060
    %1062 = vmatprep.subr.mxu0 0.0
    %v1063 = vand.u32 %v70, 4294901760
    %1064 = vmatpush1.msra.mxu0 %v1063
    %1065 = vmatprep.subr.mxu0 0.0
    %v1066 = vand.u32 %v69, 4294901760
    %1067 = vmatpush1.msra.mxu0 %v1066
    %1068 = vmatprep.subr.mxu0 0.0
    %v1069 = vand.u32 %v68, 4294901760
    %1070 = vmatpush1.msra.mxu0 %v1069
    %1071 = vmatprep.subr.mxu0 0.0
    %v1072 = vand.u32 %v67, 4294901760
    %1073 = vmatpush1.msra.mxu0 %v1072
    %1074 = vmatprep.subr.mxu0 0.0
    %v1075 = vand.u32 %v66, 4294901760
    %1076 = vmatpush1.msra.mxu0 %v1075
    %1077 = vmatprep.subr.mxu0 0.0
    %v1078 = vand.u32 %v65, 4294901760
    %1079 = vmatpush1.msra.mxu0 %v1078
    %1080 = vmatprep.subr.mxu0 0.0
    %v1081 = vand.u32 %v64, 4294901760
    %1082 = vmatpush1.msra.mxu0 %v1081
    %1083 = vmatprep.subr.mxu0 0.0
    %v1084 = vand.u32 %v63, 4294901760
    %1085 = vmatpush1.msra.mxu0 %v1084
    %1086 = vmatprep.subr.mxu0 0.0
    %v1087 = vand.u32 %v62, 4294901760
    %1088 = vmatpush1.msra.mxu0 %v1087
    %1089 = vmatprep.subr.mxu0 0.0
    %v1090 = vand.u32 %v61, 4294901760
    %1091 = vmatpush1.msra.mxu0 %v1090
    %1092 = vmatprep.subr.mxu0 0.0
    %v1093 = vand.u32 %v60, 4294901760
    %1094 = vmatpush1.msra.mxu0 %v1093
    %1095 = vmatprep.subr.mxu0 0.0
    %v1096 = vand.u32 %v59, 4294901760
    %1097 = vmatpush1.msra.mxu0 %v1096
    %1098 = vmatprep.subr.mxu0 0.0
    %v1099 = vand.u32 %v58, 4294901760
    %1100 = vmatpush1.msra.mxu0 %v1099
    %1101 = vmatprep.subr.mxu0 0.0
    %v1102 = vand.u32 %v57, 4294901760
    %1103 = vmatpush1.msra.mxu0 %v1102
    %1104 = vmatprep.subr.mxu0 0.0
    %v1105 = vand.u32 %v56, 4294901760
    %1106 = vmatpush1.msra.mxu0 %v1105
    %1107 = vmatprep.subr.mxu0 0.0
    %1108 = vmatpush2.msra.mxu0 0.0
    %1109 = vmatprep.subr.mxu0 0.0
    %1110 = vmatpush2.msra.mxu0 0.0
    %1111 = vmatprep.subr.mxu0 0.0
    %1112 = vmatpush2.msra.mxu0 0.0
    %1113 = vmatprep.subr.mxu0 0.0
    %1114 = vmatpush2.msra.mxu0 0.0
    %1115 = vmatprep.subr.mxu0 0.0
    %1116 = vmatpush2.msra.mxu0 0.0
    %1117 = vmatprep.subr.mxu0 0.0
    %1118 = vmatpush2.msra.mxu0 0.0
    %1119 = vmatprep.subr.mxu0 0.0
    %1120 = vmatpush2.msra.mxu0 0.0
    %1121 = vmatprep.subr.mxu0 0.0
    %1122 = vmatpush2.msra.mxu0 0.0
    %1123 = vmatprep.subr.mxu0 0.0
    %1124 = vmatpush2.msra.mxu0 0.0
    %1125 = vmatprep.subr.mxu0 0.0
    %1126 = vmatpush2.msra.mxu0 0.0
    %1127 = vmatprep.subr.mxu0 0.0
    %1128 = vmatpush2.msra.mxu0 0.0
    %1129 = vmatprep.subr.mxu0 0.0
    %1130 = vmatpush2.msra.mxu0 0.0
    %1131 = vmatprep.subr.mxu0 0.0
    %1132 = vmatpush2.msra.mxu0 0.0
    %1133 = vmatprep.subr.mxu0 0.0
    %1134 = vmatpush2.msra.mxu0 0.0
    %1135 = vmatprep.subr.mxu0 0.0
    %1136 = vmatpush2.msra.mxu0 0.0
    %1137 = vmatprep.subr.mxu0 0.0
    %1138 = vmatpush2.msra.mxu0 0.0
    %1139 = vmatprep.mubr.f32.mxu0 0.0
    %v1140 = vand.u32 %v55, 4294901760
    %v1141 = vsub.f32 %v55, %v1140
    %v1142 = vand.u32 %v1141, 4294901760
    %1143 = vmatmul.mubr.f32.gmra.mxu0 %v1142
    %v1144 = vpop.f32.mrf.mxu0
    %v1145 = vadd.f32 %v1056, %v1144
    %v1146 = vpop.f32.mrf.mxu0
    %1147 = vdwg.mxu0
    %1148 = vmatprep.subr.mxu0 0.0
    %v1149 = vand.u32 %v71, 4294901760
    %v1150 = vsub.f32 %v71, %v1149
    %v1151 = vand.u32 %v1150, 4294901760
    %1152 = vmatpush1.msra.mxu0 %v1151
    %1153 = vmatprep.subr.mxu0 0.0
    %v1154 = vand.u32 %v70, 4294901760
    %v1155 = vsub.f32 %v70, %v1154
    %v1156 = vand.u32 %v1155, 4294901760
    %1157 = vmatpush1.msra.mxu0 %v1156
    %1158 = vmatprep.subr.mxu0 0.0
    %v1159 = vand.u32 %v69, 4294901760
    %v1160 = vsub.f32 %v69, %v1159
    %v1161 = vand.u32 %v1160, 4294901760
    %1162 = vmatpush1.msra.mxu0 %v1161
    %1163 = vmatprep.subr.mxu0 0.0
    %v1164 = vand.u32 %v68, 4294901760
    %v1165 = vsub.f32 %v68, %v1164
    %v1166 = vand.u32 %v1165, 4294901760
    %1167 = vmatpush1.msra.mxu0 %v1166
    %1168 = vmatprep.subr.mxu0 0.0
    %v1169 = vand.u32 %v67, 4294901760
    %v1170 = vsub.f32 %v67, %v1169
    %v1171 = vand.u32 %v1170, 4294901760
    %1172 = vmatpush1.msra.mxu0 %v1171
    %1173 = vmatprep.subr.mxu0 0.0
    %v1174 = vand.u32 %v66, 4294901760
    %v1175 = vsub.f32 %v66, %v1174
    %v1176 = vand.u32 %v1175, 4294901760
    %1177 = vmatpush1.msra.mxu0 %v1176
    %1178 = vmatprep.subr.mxu0 0.0
    %v1179 = vand.u32 %v65, 4294901760
    %v1180 = vsub.f32 %v65, %v1179
    %v1181 = vand.u32 %v1180, 4294901760
    %1182 = vmatpush1.msra.mxu0 %v1181
    %1183 = vmatprep.subr.mxu0 0.0
    %v1184 = vand.u32 %v64, 4294901760
    %v1185 = vsub.f32 %v64, %v1184
    %v1186 = vand.u32 %v1185, 4294901760
    %1187 = vmatpush1.msra.mxu0 %v1186
    %1188 = vmatprep.subr.mxu0 0.0
    %v1189 = vand.u32 %v63, 4294901760
    %v1190 = vsub.f32 %v63, %v1189
    %v1191 = vand.u32 %v1190, 4294901760
    %1192 = vmatpush1.msra.mxu0 %v1191
    %1193 = vmatprep.subr.mxu0 0.0
    %v1194 = vand.u32 %v62, 4294901760
    %v1195 = vsub.f32 %v62, %v1194
    %v1196 = vand.u32 %v1195, 4294901760
    %1197 = vmatpush1.msra.mxu0 %v1196
    %1198 = vmatprep.subr.mxu0 0.0
    %v1199 = vand.u32 %v61, 4294901760
    %v1200 = vsub.f32 %v61, %v1199
    %v1201 = vand.u32 %v1200, 4294901760
    %1202 = vmatpush1.msra.mxu0 %v1201
    %1203 = vmatprep.subr.mxu0 0.0
    %v1204 = vand.u32 %v60, 4294901760
    %v1205 = vsub.f32 %v60, %v1204
    %v1206 = vand.u32 %v1205, 4294901760
    %1207 = vmatpush1.msra.mxu0 %v1206
    %1208 = vmatprep.subr.mxu0 0.0
    %v1209 = vand.u32 %v59, 4294901760
    %v1210 = vsub.f32 %v59, %v1209
    %v1211 = vand.u32 %v1210, 4294901760
    %1212 = vmatpush1.msra.mxu0 %v1211
    %1213 = vmatprep.subr.mxu0 0.0
    %v1214 = vand.u32 %v58, 4294901760
    %v1215 = vsub.f32 %v58, %v1214
    %v1216 = vand.u32 %v1215, 4294901760
    %1217 = vmatpush1.msra.mxu0 %v1216
    %1218 = vmatprep.subr.mxu0 0.0
    %v1219 = vand.u32 %v57, 4294901760
    %v1220 = vsub.f32 %v57, %v1219
    %v1221 = vand.u32 %v1220, 4294901760
    %1222 = vmatpush1.msra.mxu0 %v1221
    %1223 = vmatprep.subr.mxu0 0.0
    %v1224 = vand.u32 %v56, 4294901760
    %v1225 = vsub.f32 %v56, %v1224
    %v1226 = vand.u32 %v1225, 4294901760
    %1227 = vmatpush1.msra.mxu0 %v1226
    %1228 = vmatprep.subr.mxu0 0.0
    %1229 = vmatpush2.msra.mxu0 0.0
    %1230 = vmatprep.subr.mxu0 0.0
    %1231 = vmatpush2.msra.mxu0 0.0
    %1232 = vmatprep.subr.mxu0 0.0
    %1233 = vmatpush2.msra.mxu0 0.0
    %1234 = vmatprep.subr.mxu0 0.0
    %1235 = vmatpush2.msra.mxu0 0.0
    %1236 = vmatprep.subr.mxu0 0.0
    %1237 = vmatpush2.msra.mxu0 0.0
    %1238 = vmatprep.subr.mxu0 0.0
    %1239 = vmatpush2.msra.mxu0 0.0
    %1240 = vmatprep.subr.mxu0 0.0
    %1241 = vmatpush2.msra.mxu0 0.0
    %1242 = vmatprep.subr.mxu0 0.0
    %1243 = vmatpush2.msra.mxu0 0.0
    %1244 = vmatprep.subr.mxu0 0.0
    %1245 = vmatpush2.msra.mxu0 0.0
    %1246 = vmatprep.subr.mxu0 0.0
    %1247 = vmatpush2.msra.mxu0 0.0
    %1248 = vmatprep.subr.mxu0 0.0
    %1249 = vmatpush2.msra.mxu0 0.0
    %1250 = vmatprep.subr.mxu0 0.0
    %1251 = vmatpush2.msra.mxu0 0.0
    %1252 = vmatprep.subr.mxu0 0.0
    %1253 = vmatpush2.msra.mxu0 0.0
    %1254 = vmatprep.subr.mxu0 0.0
    %1255 = vmatpush2.msra.mxu0 0.0
    %1256 = vmatprep.subr.mxu0 0.0
    %1257 = vmatpush2.msra.mxu0 0.0
    %1258 = vmatprep.subr.mxu0 0.0
    %1259 = vmatpush2.msra.mxu0 0.0
    %1260 = vmatprep.mubr.f32.mxu0 0.0
    %v1261 = vand.u32 %v55, 4294901760
    %1262 = vmatmul.mubr.f32.gmra.mxu0 %v1261
    %v1263 = vpop.f32.mrf.mxu0
    %v1264 = vadd.f32 %v1145, %v1263
    %v1265 = vpop.f32.mrf.mxu0
    %1266 = vdwg.mxu0
    %1267 = vmatprep.subr.mxu0 0.0
    %v1268 = vand.u32 %v71, 4294901760
    %1269 = vmatpush1.msra.mxu0 %v1268
    %1270 = vmatprep.subr.mxu0 0.0
    %v1271 = vand.u32 %v70, 4294901760
    %1272 = vmatpush1.msra.mxu0 %v1271
    %1273 = vmatprep.subr.mxu0 0.0
    %v1274 = vand.u32 %v69, 4294901760
    %1275 = vmatpush1.msra.mxu0 %v1274
    %1276 = vmatprep.subr.mxu0 0.0
    %v1277 = vand.u32 %v68, 4294901760
    %1278 = vmatpush1.msra.mxu0 %v1277
    %1279 = vmatprep.subr.mxu0 0.0
    %v1280 = vand.u32 %v67, 4294901760
    %1281 = vmatpush1.msra.mxu0 %v1280
    %1282 = vmatprep.subr.mxu0 0.0
    %v1283 = vand.u32 %v66, 4294901760
    %1284 = vmatpush1.msra.mxu0 %v1283
    %1285 = vmatprep.subr.mxu0 0.0
    %v1286 = vand.u32 %v65, 4294901760
    %1287 = vmatpush1.msra.mxu0 %v1286
    %1288 = vmatprep.subr.mxu0 0.0
    %v1289 = vand.u32 %v64, 4294901760
    %1290 = vmatpush1.msra.mxu0 %v1289
    %1291 = vmatprep.subr.mxu0 0.0
    %v1292 = vand.u32 %v63, 4294901760
    %1293 = vmatpush1.msra.mxu0 %v1292
    %1294 = vmatprep.subr.mxu0 0.0
    %v1295 = vand.u32 %v62, 4294901760
    %1296 = vmatpush1.msra.mxu0 %v1295
    %1297 = vmatprep.subr.mxu0 0.0
    %v1298 = vand.u32 %v61, 4294901760
    %1299 = vmatpush1.msra.mxu0 %v1298
    %1300 = vmatprep.subr.mxu0 0.0
    %v1301 = vand.u32 %v60, 4294901760
    %1302 = vmatpush1.msra.mxu0 %v1301
    %1303 = vmatprep.subr.mxu0 0.0
    %v1304 = vand.u32 %v59, 4294901760
    %1305 = vmatpush1.msra.mxu0 %v1304
    %1306 = vmatprep.subr.mxu0 0.0
    %v1307 = vand.u32 %v58, 4294901760
    %1308 = vmatpush1.msra.mxu0 %v1307
    %1309 = vmatprep.subr.mxu0 0.0
    %v1310 = vand.u32 %v57, 4294901760
    %1311 = vmatpush1.msra.mxu0 %v1310
    %1312 = vmatprep.subr.mxu0 0.0
    %v1313 = vand.u32 %v56, 4294901760
    %1314 = vmatpush1.msra.mxu0 %v1313
    %1315 = vmatprep.subr.mxu0 0.0
    %1316 = vmatpush2.msra.mxu0 0.0
    %1317 = vmatprep.subr.mxu0 0.0
    %1318 = vmatpush2.msra.mxu0 0.0
    %1319 = vmatprep.subr.mxu0 0.0
    %1320 = vmatpush2.msra.mxu0 0.0
    %1321 = vmatprep.subr.mxu0 0.0
    %1322 = vmatpush2.msra.mxu0 0.0
    %1323 = vmatprep.subr.mxu0 0.0
    %1324 = vmatpush2.msra.mxu0 0.0
    %1325 = vmatprep.subr.mxu0 0.0
    %1326 = vmatpush2.msra.mxu0 0.0
    %1327 = vmatprep.subr.mxu0 0.0
    %1328 = vmatpush2.msra.mxu0 0.0
    %1329 = vmatprep.subr.mxu0 0.0
    %1330 = vmatpush2.msra.mxu0 0.0
    %1331 = vmatprep.subr.mxu0 0.0
    %1332 = vmatpush2.msra.mxu0 0.0
    %1333 = vmatprep.subr.mxu0 0.0
    %1334 = vmatpush2.msra.mxu0 0.0
    %1335 = vmatprep.subr.mxu0 0.0
    %1336 = vmatpush2.msra.mxu0 0.0
    %1337 = vmatprep.subr.mxu0 0.0
    %1338 = vmatpush2.msra.mxu0 0.0
    %1339 = vmatprep.subr.mxu0 0.0
    %1340 = vmatpush2.msra.mxu0 0.0
    %1341 = vmatprep.subr.mxu0 0.0
    %1342 = vmatpush2.msra.mxu0 0.0
    %1343 = vmatprep.subr.mxu0 0.0
    %1344 = vmatpush2.msra.mxu0 0.0
    %1345 = vmatprep.subr.mxu0 0.0
    %1346 = vmatpush2.msra.mxu0 0.0
    %1347 = vmatprep.mubr.f32.mxu0 0.0
    %v1348 = vand.u32 %v55, 4294901760
    %1349 = vmatmul.mubr.f32.gmra.mxu0 %v1348
    %v1350 = vpop.f32.mrf.mxu0
    %v1351 = vadd.f32 %v1264, %v1350
    %v1352 = vpop.f32.mrf.mxu0
    %1353 = vdwg.mxu0
    %v1354 = vlaneseq
    %v1355 = vand.u32 %v1354, 127
    %v1356 = vand.u32 %v1355, 15
    %vm1357 = vcmp.eq.s32.totalorder %v1356, 0
    %s1358 = smul.u32 0, 8
    %s1359 = ssub.s32 8, %s1358
    %v1360 = vlaneseq
    %v1361 = vshrl.u32 %v1360, 7
    %v1362 = vstv %s1359
    %vm1363 = vcmp.lt.s32.totalorder %v1361, %v1362
    %v1364 = vsel %vm1357, 1, 0
    %vm1365 = vcmp.eq.s32.totalorder %v1364, 1
    %vm1366 = vmand %vm1365, %vm1363
    %v1367 = vlog2.pop %v710
    %v1368 = vmul.f32 %v1367, 0.6931472
    %v1369 = vlog2.pop %v1351
    %v1370 = vmul.f32 %v1369, 0.6931472
    %v1371 = vsub.f32 %v1368, %v1370
    %v1372 = vsel %vm1366, %v1371, 0.0
    %v1373 = vadd.f32 %v1372, 0.0
    %1374 = vst [vmem:[#allocation8] sm:$0xff] %v1373
    // Predicated region
    $region26: #{tpu_custom_call.1} parent=1 // pred_check
      _
    $region27: #{tpu_custom_call.1} parent=1 // pred_check_branch
      %1376 = sbr.rel (0) target = $region29
    $region28: #{tpu_custom_call.1} parent=1 // pred_region
      %s1378 = ssub.s32 128, 128
      %1379 = vsyncadd [#allocation4], %s1378
      %s1381 = sshll.u32 [#allocation8], 4
      %s1382 = int_to_ptr.vmem [resolvable:$true] %s1381
      %1384 = dma.vmem_to_hbm [thread:$0]  %s1382, 128, %s3, [#allocation4]
    $region29: #{tpu_custom_call.1} parent=1 // pred_fallthru
      _
    // Predicated region
    $region30: #{tpu_custom_call.1} parent=1 // pred_check
      _
    $region31: #{tpu_custom_call.1} parent=1 // pred_check_branch
      %1386 = sbr.rel (0) target = $region33
    $region32: #{tpu_custom_call.1} parent=1 // pred_region
      %1387 = dma.done [#allocation4], 128
    $region33: #{tpu_custom_call.1} parent=1 // pred_fallthru
      _
    %1388 = vsyncpa [#allocation3], 1
    %1389 = vsyncpa [#allocation6], 1
    %1390 = vsyncpa [#allocation4], 1

</llo_original>
